<compile_context>
chip_gen: v5e
topology: v5e:2x2
jax: 0.10.0
libtpu: 0.0.40
codegen_flags: <defaults>
</compile_context>

<pallas_src>
import functools

import jax
import jax.numpy as jnp
from jax.experimental import pallas as pl
from jax.experimental.pallas import tpu as pltpu


def _focal_loss_kernel(logits_ref, targets_ref, alpha_ref, out_ref, acc_ref,
                       *, gamma, n_valid, block_n, steps, eps):
    p = pl.program_id(0)          # parallel slice (one per TensorCore on v7x)
    j = pl.program_id(1)          # sequential step within the slice

    @pl.when(j == 0)
    def _():
        acc_ref[...] = jnp.zeros_like(acc_ref)

    logits = logits_ref[...].astype(jnp.float32)             # (TB, C)
    tgt = targets_ref[...]                                    # (TB, 1) int32
    alpha_row = alpha_ref[...].astype(jnp.float32)            # (1, C)

    # Stable softmax pieces; the only O(TB*C) transcendental is the exp.
    m = jnp.max(logits, axis=-1, keepdims=True)               # (TB, 1)
    e = jnp.exp(logits - m)                                    # (TB, C)
    denom = jnp.sum(e, axis=-1, keepdims=True)                 # (TB, 1)

    # One-hot of the target class; reused for both the true-class prob and the
    # per-row alpha weight (no per-row alpha stream from HBM).  Out-of-range
    # targets give an all-zero one-hot (p_true -> eps) rather than an error,
    # mirroring the reference's gather semantics.
    col = jax.lax.broadcasted_iota(jnp.int32, logits.shape, 1)
    onehot = (col == tgt).astype(jnp.float32)                  # (TB, C)
    e_true = jnp.sum(e * onehot, axis=-1, keepdims=True)        # (TB, 1)
    alpha_t = jnp.sum(alpha_row * onehot, axis=-1, keepdims=True)

    # p_true = softmax(logits)[target], clamped exactly like the reference.
    p_true = jnp.clip(e_true / denom, eps, 1.0)
    log_p = jnp.log(p_true)

    one_minus_p = 1.0 - p_true
    if float(gamma) == int(gamma) and gamma >= 0:
        # integer gamma -> explicit multiplies, no pow (exp/log) on the EUP
        focal = jnp.ones_like(one_minus_p)
        for _ in range(int(gamma)):
            focal = focal * one_minus_p
    else:
        focal = one_minus_p ** jnp.float32(gamma)

    loss = -alpha_t * focal * log_p                             # (TB, 1)

    # Mask ragged-tail rows and any redundant (clamped) slot of the second
    # slice: global row index >= n_valid contributes zero.  jnp.where also
    # kills NaN/Inf arising from unspecified data in the ragged region.
    row0 = (p * steps + j) * block_n
    rows = row0 + jax.lax.broadcasted_iota(jnp.int32, loss.shape, 0)
    loss = jnp.where(rows < n_valid, loss, 0.0)

    # Per-step scalar accumulation (sublane reduce on the XLU, hidden under
    # the logits DMA) into a tiny (1, 1) VMEM accumulator.
    acc_ref[...] = acc_ref[...] + jnp.sum(loss)

    @pl.when(j == steps - 1)
    def _():
        # One lane-dense, full-vreg store of the per-slice partial sum.
        out_ref[...] = jnp.zeros_like(out_ref) + jnp.sum(acc_ref[...])


def _num_tensorcores():
    """Best effort: 2 TensorCores per chip on v7x, 1 on v5e/v6e."""
    try:
        kind = jax.devices()[0].device_kind.lower()
    except Exception:
        return 1
    return 2 if ("v7" in kind or "7x" in kind) else 1


def _vmem_capacity_bytes():
    try:
        return int(pltpu.get_tpu_info().vmem_capacity_bytes)
    except Exception:
        return 64 * 1024 * 1024     # conservative (v7x-sized) fallback


def focal_loss(logits, targets, alpha, gamma=2.0, block_n=None, n_par=None,
               logits_buffers=2):
    """Mean focal loss.

    logits: (N, C) float (f32 or bf16 -- bf16 stays bf16 through the DMA),
    targets: (N,) int, alpha: (C,) array, scalar, or None.
    """
    logits = jnp.asarray(logits)                 # keep original dtype
    N, C = logits.shape
    targets2d = jnp.asarray(targets).reshape(N, 1).astype(jnp.int32)

    # alpha as a tiny (1, C) row; the per-row gather happens in-kernel.
    if alpha is None:
        alpha_row = jnp.ones((1, C), jnp.float32)
    else:
        alpha_arr = jnp.asarray(alpha, jnp.float32)
        if alpha_arr.ndim >= 1:
            alpha_row = alpha_arr.reshape(1, C)
        else:
            alpha_row = jnp.full((1, C), alpha_arr, jnp.float32)

    # ---- generation-aware tiling --------------------------------------------
    itemsize = jnp.dtype(logits.dtype).itemsize
    vmem_cap = _vmem_capacity_bytes()
    if vmem_cap >= 100 * 1024 * 1024:            # v5e / v6e: 128 MiB physical
        slab_target = 8 * 1024 * 1024
        vmem_limit = 96 * 1024 * 1024
    else:                                         # v7x: 64 MiB per TensorCore
        slab_target = 4 * 1024 * 1024
        vmem_limit = 48 * 1024 * 1024

    if block_n is None:
        # Size the batch tile by bytes (dtype-aware), capped by the problem.
        row_bytes = max(1, C * itemsize)
        block_n = max(8, (slab_target // row_bytes) // 8 * 8)
        block_n = min(block_n, max(8, ((N + 7) // 8) * 8))
    assert block_n > 0 and block_n % 8 == 0, "block_n must be a positive multiple of 8"

    num_blocks = -(-N // block_n)
    if n_par is None:
        n_par = _num_tensorcores()
    n_par = max(1, min(int(n_par), num_blocks))
    steps = -(-num_blocks // n_par)

    # Ragged handling: NO jnp.pad of logits (that would be a full HBM copy).
    # The last real block may extend past N (unspecified data, masked in the
    # kernel), and the last slot of the second slice may be redundant; the
    # index_map is clamped so no block is ever addressed wholly outside the
    # array, and its rows are masked by rows < n_valid.
    last_block = num_blocks - 1

    def data_map(p, j):
        return (jnp.minimum(p * steps + j, last_block), 0)

    kernel = functools.partial(
        _focal_loss_kernel, gamma=float(gamma), n_valid=N,
        block_n=block_n, steps=steps, eps=1e-8)

    cost = pl.CostEstimate(
        flops=10 * N * C,
        transcendentals=N * C + N,
        bytes_accessed=N * C * itemsize + N * 4 + C * 4 + n_par * 8 * 128 * 4)

    # Optional deeper buffering of the logits stream (useful on v7x if the
    # smaller slab leaves a DMA bubble); default depth 2 == Pallas default.
    if logits_buffers != 2:
        logits_spec = pl.BlockSpec((block_n, C), data_map,
                                   pipeline_mode=pl.Buffered(int(logits_buffers)))
    else:
        logits_spec = pl.BlockSpec((block_n, C), data_map)

    out = pl.pallas_call(
        kernel,
        out_shape=jax.ShapeDtypeStruct((n_par * 8, 128), jnp.float32),
        grid_spec=pltpu.PrefetchScalarGridSpec(
            num_scalar_prefetch=0,
            grid=(n_par, steps),
            in_specs=[
                logits_spec,                                    # logits  (block_n, C)
                pl.BlockSpec((block_n, 1), data_map),           # targets (block_n, 1)
                pl.BlockSpec((1, C), lambda p, j: (0, 0)),      # alpha row (1, C)
            ],
            out_specs=pl.BlockSpec((8, 128), lambda p, j: (p, 0)),  # per-slice partial
            scratch_shapes=[pltpu.VMEM((1, 1), jnp.float32)],
        ),
        compiler_params=pltpu.CompilerParams(
            dimension_semantics=("parallel", "arbitrary"),
            vmem_limit_bytes=vmem_limit),
        cost_estimate=cost,
    )(logits, targets2d, alpha_row)

    partials = out[0::8, 0]          # one partial sum per parallel slice
    return jnp.sum(partials) / jnp.float32(N)


def _focal_loss_ref(logits, targets, alpha, gamma=2.0):
    """Pure-JAX reference mirroring the PyTorch module."""
    eps = 1e-8
    probs = jax.nn.softmax(logits.astype(jnp.float32), axis=-1)
    p_true = jnp.take_along_axis(probs, targets[:, None], axis=1)[:, 0]
    p_true = jnp.clip(p_true, eps, 1.0)
    if alpha is None:
        alpha_t = 1.0
    else:
        alpha_arr = jnp.asarray(alpha, jnp.float32)
        alpha_t = alpha_arr[targets] if alpha_arr.ndim >= 1 else alpha_arr
    loss = -alpha_t * (1.0 - p_true) ** gamma * jnp.log(p_true)
    return jnp.mean(loss)


if __name__ == "__main__":
    key = jax.random.PRNGKey(0)
    k1, k2, k3, k4, k5, k6 = jax.random.split(key, 6)

    C = 8
    alpha = jnp.linspace(0.25, 1.0, C, dtype=jnp.float32)
    gamma = 2.0

    # Case 1: N=16, auto tile (single block, no ragged tail).
    N = 16
    logits = jax.random.normal(k1, (N, C), dtype=jnp.float32) * 3.0
    targets = jax.random.randint(k2, (N,), 0, C, dtype=jnp.int32)
    out1 = jax.block_until_ready(focal_loss(logits, targets, alpha, gamma=gamma))
    ref1 = _focal_loss_ref(logits, targets, alpha, gamma=gamma)
    assert jnp.allclose(out1, ref1, rtol=1e-5, atol=1e-6), (out1, ref1)

    # Case 2: N=13 with a forced 8-row tile -> ragged last block (no padded
    # copy of logits; garbage rows are masked in-kernel).
    N2 = 13
    logits2 = jax.random.normal(k3, (N2, C), dtype=jnp.float32) * 2.0
    targets2 = jax.random.randint(k4, (N2,), 0, C, dtype=jnp.int32)
    out2 = jax.block_until_ready(
        focal_loss(logits2, targets2, alpha, gamma=gamma, block_n=8))
    ref2 = _focal_loss_ref(logits2, targets2, alpha, gamma=gamma)
    assert jnp.allclose(out2, ref2, rtol=1e-5, atol=1e-6), (out2, ref2)

    # Case 3: N=20, forced n_par=2 with an odd number of blocks -> exercises
    # the clamped index_map plus redundant-slot masking (the two-TensorCore
    # v7x path; also correct as a serial outer loop on single-core chips).
    N3 = 20
    logits3 = jax.random.normal(k5, (N3, C), dtype=jnp.float32)
    targets3 = jax.random.randint(k6, (N3,), 0, C, dtype=jnp.int32)
    out3 = jax.block_until_ready(
        focal_loss(logits3, targets3, alpha, gamma=gamma, block_n=8, n_par=2))
    ref3 = _focal_loss_ref(logits3, targets3, alpha, gamma=gamma)
    assert jnp.allclose(out3, ref3, rtol=1e-5, atol=1e-6), (out3, ref3)

    # Case 4: bf16 logits (kept bf16 through the HBM->VMEM DMA, upcast only
    # in-kernel) with a scalar alpha.
    logits4 = (jax.random.normal(k1, (N, C), dtype=jnp.float32) * 2.0).astype(jnp.bfloat16)
    targets4 = jax.random.randint(k2, (N,), 0, C, dtype=jnp.int32)
    out4 = jax.block_until_ready(focal_loss(logits4, targets4, 0.5, gamma=gamma))
    ref4 = _focal_loss_ref(logits4, targets4, 0.5, gamma=gamma)
    assert jnp.allclose(out4, ref4, rtol=1e-5, atol=1e-6), (out4, ref4)

    print("KERNEL_OK")
</pallas_src>

<mosaic_0001>
module attributes {stable_mosaic.version = 11 : i64} {
  func.func @_focal_loss_kernel(%arg0: i32, %arg1: i32, %arg2: memref<16x8xf32, #tpu.memory_space<vmem>>, %arg3: memref<16x1xi32, #tpu.memory_space<vmem>>, %arg4: memref<1x8xf32, #tpu.memory_space<vmem>>, %arg5: memref<8x128xf32, #tpu.memory_space<vmem>>, %arg6: memref<1x1xf32, #tpu.memory_space<vmem>>) attributes {dimension_semantics = [#tpu.dimension_semantics<parallel>, #tpu.dimension_semantics<arbitrary>], iteration_bounds = array<i64: 1, 1>, scalar_prefetch = 0 : i64, scratch_operands = 1 : i64, tpu.core_type = #tpu.core_type<tc>, window_params = [{transform_indices = @transform_0, window_bounds = array<i64: 16, 8>}, {transform_indices = @transform_1, window_bounds = array<i64: 16, 1>}, {pipeline_mode = #tpu.pipeline_mode<synchronous>, transform_indices = @transform_2, window_bounds = array<i64: 1, 8>}, {transform_indices = @transform_3, window_bounds = array<i64: 8, 128>}]} {
    %c0_i32 = arith.constant 0 : i32
    %0 = arith.cmpi eq, %arg1, %c0_i32 : i32
    %1 = arith.extui %0 : i1 to i32
    %c0_i32_0 = arith.constant 0 : i32
    %2 = arith.cmpi ne, %1, %c0_i32_0 : i32
    scf.if %2 {
      %cst_23 = arith.constant 0.000000e+00 : f32
      %61 = vector.broadcast %cst_23 : f32 to vector<1x1xf32>
      %c0_24 = arith.constant 0 : index
      %c0_25 = arith.constant 0 : index
      %62 = vector.load %arg6[%c0_24, %c0_25] : memref<1x1xf32, #tpu.memory_space<vmem>>, vector<1x1xf32>
      tpu.vector_store %arg6[%c0_24, %c0_25], %61 {strides = array<i32>} : memref<1x1xf32, #tpu.memory_space<vmem>>, vector<1x1xf32>,
    } else {
    }
    %c0 = arith.constant 0 : index
    %c0_1 = arith.constant 0 : index
    %3 = vector.load %arg2[%c0, %c0_1] : memref<16x8xf32, #tpu.memory_space<vmem>>, vector<16x8xf32>
    %c0_2 = arith.constant 0 : index
    %c0_3 = arith.constant 0 : index
    %4 = vector.load %arg3[%c0_2, %c0_3] : memref<16x1xi32, #tpu.memory_space<vmem>>, vector<16x1xi32>
    %c0_4 = arith.constant 0 : index
    %c0_5 = arith.constant 0 : index
    %5 = vector.load %arg4[%c0_4, %c0_5] : memref<1x8xf32, #tpu.memory_space<vmem>>, vector<1x8xf32>
    %cst = arith.constant dense<0xFF800000> : vector<16xf32>
    %6 = vector.multi_reduction <maximumf>, %3, %cst [1] : vector<16x8xf32> to vector<16xf32>
    %7 = vector.shape_cast %6 : vector<16xf32> to vector<16x1xf32>
    %8 = vector.broadcast %7 : vector<16x1xf32> to vector<16x8xf32>
    %9 = arith.subf %3, %8 : vector<16x8xf32>
    %10 = math.exp %9 : vector<16x8xf32>
    %cst_6 = arith.constant dense<0.000000e+00> : vector<16xf32>
    %11 = vector.multi_reduction <add>, %10, %cst_6 [1] : vector<16x8xf32> to vector<16xf32>
    %12 = vector.shape_cast %11 : vector<16xf32> to vector<16x1xf32>
    %13 = tpu.iota {dimensions = array<i32: 1>} : vector<16x8xi32>
    %14 = vector.broadcast %4 : vector<16x1xi32> to vector<16x8xi32>
    %15 = arith.cmpi eq, %13, %14 : vector<16x8xi32>
    %16 = arith.extui %15 : vector<16x8xi1> to vector<16x8xi32>
    %17 = arith.sitofp %16 : vector<16x8xi32> to vector<16x8xf32>
    %18 = arith.mulf %10, %17 : vector<16x8xf32>
    %cst_7 = arith.constant dense<0.000000e+00> : vector<16xf32>
    %19 = vector.multi_reduction <add>, %18, %cst_7 [1] : vector<16x8xf32> to vector<16xf32>
    %20 = vector.shape_cast %19 : vector<16xf32> to vector<16x1xf32>
    %21 = vector.broadcast %5 : vector<1x8xf32> to vector<16x8xf32>
    %22 = arith.mulf %21, %17 : vector<16x8xf32>
    %cst_8 = arith.constant dense<0.000000e+00> : vector<16xf32>
    %23 = vector.multi_reduction <add>, %22, %cst_8 [1] : vector<16x8xf32> to vector<16xf32>
    %24 = vector.shape_cast %23 : vector<16xf32> to vector<16x1xf32>
    %25 = arith.divf %20, %12 : vector<16x1xf32>
    %cst_9 = arith.constant 9.99999993E-9 : f32
    %cst_10 = arith.constant 1.000000e+00 : f32
    %26 = vector.broadcast %cst_9 : f32 to vector<16x1xf32>
    %27 = arith.maximumf %26, %25 : vector<16x1xf32>
    %28 = vector.broadcast %cst_10 : f32 to vector<16x1xf32>
    %29 = arith.minimumf %28, %27 : vector<16x1xf32>
    %30 = math.log %29 : vector<16x1xf32>
    %cst_11 = arith.constant 1.000000e+00 : f32
    %31 = vector.broadcast %cst_11 : f32 to vector<16x1xf32>
    %32 = arith.subf %31, %29 : vector<16x1xf32>
    %cst_12 = arith.constant 1.000000e+00 : f32
    %33 = vector.broadcast %cst_12 : f32 to vector<16x1xf32>
    %34 = arith.mulf %33, %32 : vector<16x1xf32>
    %35 = arith.mulf %34, %32 : vector<16x1xf32>
    %cst_13 = arith.constant 0.000000e+00 : f32
    %36 = vector.broadcast %cst_13 : f32 to vector<16x1xf32>
    %37 = arith.subf %36, %24 : vector<16x1xf32>
    %38 = arith.mulf %37, %35 : vector<16x1xf32>
    %39 = arith.mulf %38, %30 : vector<16x1xf32>
    %c1_i32 = arith.constant 1 : i32
    %40 = arith.muli %arg0, %c1_i32 : i32
    %41 = arith.addi %40, %arg1 : i32
    %c16_i32 = arith.constant 16 : i32
    %42 = arith.muli %41, %c16_i32 : i32
    %43 = tpu.iota {dimensions = array<i32: 0>} : vector<16x1xi32>
    %44 = vector.broadcast %42 : i32 to vector<16x1xi32>
    %45 = arith.addi %44, %43 : vector<16x1xi32>
    %c16_i32_14 = arith.constant 16 : i32
    %46 = vector.broadcast %c16_i32_14 : i32 to vector<16x1xi32>
    %47 = arith.cmpi slt, %45, %46 : vector<16x1xi32>
    %cst_15 = arith.constant 0.000000e+00 : f32
    %48 = vector.broadcast %cst_15 : f32 to vector<16x1xf32>
    %49 = arith.select %47, %39, %48 : vector<16x1xi1>, vector<16x1xf32>
    %c0_16 = arith.constant 0 : index
    %c0_17 = arith.constant 0 : index
    %50 = vector.load %arg6[%c0_16, %c0_17] : memref<1x1xf32, #tpu.memory_space<vmem>>, vector<1x1xf32>
    %51 = vector.shape_cast %49 : vector<16x1xf32> to vector<1x16x1xf32>
    %cst_18 = arith.constant dense<0.000000e+00> : vector<1xf32>
    %52 = vector.multi_reduction <add>, %51, %cst_18 [1, 2] : vector<1x16x1xf32> to vector<1xf32>
    %53 = vector.shape_cast %52 : vector<1xf32> to vector<1x1x1xf32>
    %54 = vector.extract %53[0, 0, 0] : f32 from vector<1x1x1xf32>
    %55 = vector.broadcast %54 : f32 to vector<1x1xf32>
    %56 = arith.addf %50, %55 : vector<1x1xf32>
    %c0_19 = arith.constant 0 : index
    %c0_20 = arith.constant 0 : index
    %57 = vector.load %arg6[%c0_19, %c0_20] : memref<1x1xf32, #tpu.memory_space<vmem>>, vector<1x1xf32>
    tpu.vector_store %arg6[%c0_19, %c0_20], %56 {strides = array<i32>} : memref<1x1xf32, #tpu.memory_space<vmem>>, vector<1x1xf32>,
    %c0_i32_21 = arith.constant 0 : i32
    %58 = arith.cmpi eq, %arg1, %c0_i32_21 : i32
    %59 = arith.extui %58 : i1 to i32
    %c0_i32_22 = arith.constant 0 : i32
    %60 = arith.cmpi ne, %59, %c0_i32_22 : i32
    scf.if %60 {
      %cst_23 = arith.constant 0.000000e+00 : f32
      %61 = vector.broadcast %cst_23 : f32 to vector<8x128xf32>
      %c0_24 = arith.constant 0 : index
      %c0_25 = arith.constant 0 : index
      %62 = vector.load %arg6[%c0_24, %c0_25] : memref<1x1xf32, #tpu.memory_space<vmem>>, vector<1x1xf32>
      %63 = vector.shape_cast %62 : vector<1x1xf32> to vector<1x1x1xf32>
      %cst_26 = arith.constant dense<0.000000e+00> : vector<1xf32>
      %64 = vector.multi_reduction <add>, %63, %cst_26 [1, 2] : vector<1x1x1xf32> to vector<1xf32>
      %65 = vector.shape_cast %64 : vector<1xf32> to vector<1x1x1xf32>
      %66 = vector.extract %65[0, 0, 0] : f32 from vector<1x1x1xf32>
      %67 = vector.broadcast %66 : f32 to vector<8x128xf32>
      %68 = arith.addf %61, %67 : vector<8x128xf32>
      %c0_27 = arith.constant 0 : index
      %c0_28 = arith.constant 0 : index
      %69 = vector.load %arg5[%c0_27, %c0_28] : memref<8x128xf32, #tpu.memory_space<vmem>>, vector<8x128xf32>
      tpu.vector_store %arg5[%c0_27, %c0_28], %68 {strides = array<i32>} : memref<8x128xf32, #tpu.memory_space<vmem>>, vector<8x128xf32>,
    } else {
    }
    return
  }
  func.func @transform_0(%arg0: i32, %arg1: i32) -> (i32, i32) {
    %c1_i32 = arith.constant 1 : i32
    %0 = arith.muli %arg0, %c1_i32 : i32
    %1 = arith.addi %0, %arg1 : i32
    %c0_i32 = arith.constant 0 : i32
    %2 = arith.minsi %1, %c0_i32 : i32
    %c0_i32_0 = arith.constant 0 : i32
    %c0_i32_1 = arith.constant 0 : i32
    return %2, %c0_i32_0 : i32, i32
  }
  func.func @transform_1(%arg0: i32, %arg1: i32) -> (i32, i32) {
    %c1_i32 = arith.constant 1 : i32
    %0 = arith.muli %arg0, %c1_i32 : i32
    %1 = arith.addi %0, %arg1 : i32
    %c0_i32 = arith.constant 0 : i32
    %2 = arith.minsi %1, %c0_i32 : i32
    %c0_i32_0 = arith.constant 0 : i32
    %c0_i32_1 = arith.constant 0 : i32
    return %2, %c0_i32_0 : i32, i32
  }
  func.func @transform_2(%arg0: i32, %arg1: i32) -> (i32, i32) {
    %c0_i32 = arith.constant 0 : i32
    %c0_i32_0 = arith.constant 0 : i32
    %c0_i32_1 = arith.constant 0 : i32
    return %c0_i32, %c0_i32_0 : i32, i32
  }
  func.func @transform_3(%arg0: i32, %arg1: i32) -> (i32, i32) {
    %c0_i32 = arith.constant 0 : i32
    %c0_i32_0 = arith.constant 0 : i32
    return %arg0, %c0_i32 : i32, i32
  }
}

</mosaic_0001>

<llo_original>
// kernel: tpu_custom_call.1
$region0: #{tpu_custom_call.1}
  #allocation0 [shape = 'u32[]', space=smem, size = 0x4, offset = 0x4, fixed_abs, tag = 'smem constant byte address 0x4 - core index']
  #allocation1 [shape = 'u32[72,128]{1,0:T(1,128)}', space=vmem, size = 0x9000, scoped, tag = 'internal scratch']
  #allocation2 [shape = 'f32[1,1]{1,0:T(1,128)}', space=vmem, size = 0x200, scoped, tag = 'scratch operand']
  %s0 = inlined_call_operand.vmem [shape: f32[16,8], index: 0, kind: input, shape index: {}]
  %s1 = inlined_call_operand.vmem [shape: s32[16,1], index: 1, kind: input, shape index: {}]
  %s2 = inlined_call_operand.vmem [shape: f32[1,8], index: 2, kind: input, shape index: {}]
  %s3 = inlined_call_operand.hbm [shape: f32[8,128], index: 3, kind: output, shape index: {}]
  %s4 = sld [smem:[#allocation0]]
  $region30: #{tpu_custom_call.1} parent=0
    _
  %s6 = ssub.s32 1, %s4
  %s7 = scalar_select 0, %s6, %s4
  $region1: #{tpu_custom_call.1} parent=0
    #allocation3 [shape = 'u8[4096]{0}', space=vmem, size = 0x1000, scoped, tag = 'output window, operand 0, single buffered']
    #allocation4 [shape = 's32[1]{0}', space=sflag, size = 0x4, scoped, tag = 'scoped memory for tpu_custom_call.1']
    %8 = vsyncpa [#allocation4], 0
    // Predicated region
    $region2: #{tpu_custom_call.1} parent=1 // pred_check
      _
    $region3: #{tpu_custom_call.1} parent=1 // pred_check_branch
      %10 = sbr.rel (0) target = $region5
    $region4: #{tpu_custom_call.1} parent=1 // pred_region
      %s11 = sadd.s32 0, 0
      %p12 = scmp.lt.s32.totalorder %s11, 0
      %s13 = scalar_select %p12, %s11, 0
      %s14 = smul.u32 2, %s13
      %p15 = scmp.lt.s32.totalorder %s14, 1
      %s16 = scalar_select %p15, %s14, 1
      %s17 = smul.addr %s16, 8
      %s18 = scalar_lea.vmem %s0, %s17
      %s19 = sadd.s32 0, 0
      %p20 = scmp.lt.s32.totalorder %s19, 0
      %s21 = scalar_select %p20, %s19, 0
      %s22 = smul.u32 2, %s21
    $region5: #{tpu_custom_call.1} parent=1 // pred_fallthru
      _
    // Predicated region
    $region6: #{tpu_custom_call.1} parent=1 // pred_check
      _
    $region7: #{tpu_custom_call.1} parent=1 // pred_check_branch
      %24 = sbr.rel (0) target = $region9
    $region8: #{tpu_custom_call.1} parent=1 // pred_region
      %s25 = sadd.s32 0, 0
      %p26 = scmp.lt.s32.totalorder %s25, 0
      %s27 = scalar_select %p26, %s25, 0
      %s28 = smul.u32 2, %s27
      %p29 = scmp.lt.s32.totalorder %s28, 1
      %s30 = scalar_select %p29, %s28, 1
      %s31 = smul.addr %s30, 8
      %s32 = scalar_lea.vmem %s1, %s31
      %s33 = sadd.s32 0, 0
      %p34 = scmp.lt.s32.totalorder %s33, 0
      %s35 = scalar_select %p34, %s33, 0
      %s36 = smul.u32 2, %s35
    $region9: #{tpu_custom_call.1} parent=1 // pred_fallthru
      _
    // Predicated region
    $region10: #{tpu_custom_call.1} parent=1 // pred_check
      _
    $region11: #{tpu_custom_call.1} parent=1 // pred_check_branch
      %38 = sbr.rel (0) target = $region13
    $region12: #{tpu_custom_call.1} parent=1 // pred_region
      _
    $region13: #{tpu_custom_call.1} parent=1 // pred_fallthru
      _
    %s39 = sadd.s32 0, 0
    %p40 = scmp.lt.s32.totalorder %s39, 0
    %s41 = scalar_select %p40, %s39, 0
    %s42 = smul.u32 2, %s41
    %p43 = scmp.lt.s32.totalorder %s42, 1
    %s44 = scalar_select %p43, %s42, 1
    %s45 = smul.addr %s44, 8
    %s46 = scalar_lea.vmem %s0, %s45
    %s47 = sadd.s32 0, 0
    %p48 = scmp.lt.s32.totalorder %s47, 0
    %s49 = scalar_select %p48, %s47, 0
    %s50 = smul.u32 2, %s49
    %p51 = scmp.lt.s32.totalorder %s50, 1
    %s52 = scalar_select %p51, %s50, 1
    %s53 = smul.addr %s52, 8
    %s54 = scalar_lea.vmem %s1, %s53
    %s55 = sadd.s32 0, 0
    %p56 = scmp.lt.s32.totalorder %s55, 0
    %s57 = scalar_select %p56, %s55, 0
    %s58 = smul.u32 2, %s57
    %p59 = scmp.lt.s32.totalorder %s58, 1
    %s60 = scalar_select %p59, %s58, 1
    %s61 = smul.addr %s60, 8
    %s62 = scalar_lea.vmem %s0, %s61
    %s63 = sadd.s32 0, 0
    %p64 = scmp.lt.s32.totalorder %s63, 0
    %s65 = scalar_select %p64, %s63, 0
    %s66 = smul.u32 2, %s65
    %s67 = sadd.s32 0, 0
    %p68 = scmp.lt.s32.totalorder %s67, 0
    %s69 = scalar_select %p68, %s67, 0
    %s70 = smul.u32 2, %s69
    %p71 = scmp.lt.s32.totalorder %s70, 1
    %s72 = scalar_select %p71, %s70, 1
    %s73 = smul.addr %s72, 8
    %s74 = scalar_lea.vmem %s1, %s73
    %s75 = sadd.s32 0, 0
    %p76 = scmp.lt.s32.totalorder %s75, 0
    %s77 = scalar_select %p76, %s75, 0
    %s78 = smul.u32 2, %s77
    %p79 = scmp.eq.s32.totalorder 0, 0
    // Predicated region
    $region14: #{tpu_custom_call.1} parent=1 // pred_check
      %p80 = pneg %p79
    $region15: #{tpu_custom_call.1} parent=1 // pred_check_branch
      %82 = sbr.rel (%p80) target = $region17
    $region16: #{tpu_custom_call.1} parent=1 // pred_region
      %vm83 = vcmask 0
      %84 = vst.msk [vmem:[#allocation2] sm:$0x1] %vm83, 0.0
    $region17: #{tpu_custom_call.1} parent=1 // pred_fallthru
      _
    %v85 = vld [vmem:[%s62] sm:$0xff]
    %v86 = vld [vmem:[%s62 + $0x8] sm:$0xff]
    %v87 = vld [vmem:[%s74] sm:$0xff]
    %v88 = vld [vmem:[%s74 + $0x8] sm:$0xff]
    %v89 = vld [vmem:[%s2] sm:$0x1]
    %vm90 = vcmask 64512
    %v91 = vsel %vm90, %v85, -inf
    %92 = vmax.xlane.f32.xlu0 %v91
    %v93 = vpop.xlane.xlu0 %92
    %v94 = vsel %vm90, %v86, -inf
    %95 = vmax.xlane.f32.xlu0 %v94
    %v96 = vpop.xlane.xlu0 %95
    %v97 = vsub.f32 %v85, %v93
    %v98 = vsub.f32 %v86, %v96
    %v99 = vmul.f32 %v97, 1.442695
    %v100 = vpow.pop %v99
    %v101 = vmul.f32 %v98, 1.442695
    %v102 = vpow.pop %v101
    %v103 = vsel %vm90, %v100, 0.0
    %104 = vadd.xlane.f32.xlu0 %v103
    %v105 = vpop.xlane.xlu0 %104
    %v106 = vsel %vm90, %v102, 0.0
    %107 = vadd.xlane.f32.xlu0 %v106
    %v108 = vpop.xlane.xlu0 %107
    %v109 = vlaneseq
    %v110 = vand.u32 %v109, 127
    %111 = vset.pattern.permute.xlu0 0
    %112 = vperm.xlu0 %111, %v87
    %v113 = vpop.permute.xlu0 %112
    %114 = vset.pattern.permute.xlu0 0
    %115 = vperm.xlu0 %114, %v88
    %v116 = vpop.permute.xlu0 %115
    %vm117 = vcmp.eq.s32.totalorder %v110, %v113
    %vm118 = vcmp.eq.s32.totalorder %v110, %v116
    %v119 = vsel %vm117, 1, 0
    %v120 = vsel %vm118, 1, 0
    %v121 = vcvt.s32.f32 %v119
    %v122 = vcvt.s32.f32 %v120
    %v123 = vmul.f32 %v100, %v121
    %v124 = vmul.f32 %v102, %v122
    %v125 = vsel %vm90, %v123, 0.0
    %126 = vadd.xlane.f32.xlu0 %v125
    %v127 = vpop.xlane.xlu0 %126
    %v128 = vsel %vm90, %v124, 0.0
    %129 = vadd.xlane.f32.xlu0 %v128
    %v130 = vpop.xlane.xlu0 %129
    %v132 = vperm.slane %v89, 0
    %v134 = vmul.f32 %v132, %v121
    %v135 = vmul.f32 %v132, %v122
    %v136 = vsel %vm90, %v134, 0.0
    %137 = vadd.xlane.f32.xlu0 %v136
    %v138 = vpop.xlane.xlu0 %137
    %v139 = vsel %vm90, %v135, 0.0
    %140 = vadd.xlane.f32.xlu0 %v139
    %v141 = vpop.xlane.xlu0 %140
    %v142 = vrcp.pop %v105
    %v143 = vmul.f32 %v105, %v142
    %v144 = vsub.f32 1.0, %v143
    %v145 = vmul.f32 %v142, %v144
    %v146 = vadd.f32 %v142, %v145
    %vm147 = vweird.f32 %v105
    %vm148 = vweird.f32 %v142
    %vm149 = vmor %vm147, %vm148
    %v150 = vsel %vm149, %v142, %v146
    %v151 = vand.u32 2147483647, %v105
    %vm152 = vcmp.eq.f32.partialorder %v151, 8.507059e+37
    %v153 = vand.u32 %v105, 2147483648
    %v154 = vor.u32 1.1754944e-38, %v153
    %v155 = vsel %vm152, %v154, %v150
    %v156 = vmul.f32 %v127, %v155
    %v157 = vrcp.pop %v108
    %v158 = vmul.f32 %v108, %v157
    %v159 = vsub.f32 1.0, %v158
    %v160 = vmul.f32 %v157, %v159
    %v161 = vadd.f32 %v157, %v160
    %vm162 = vweird.f32 %v108
    %vm163 = vweird.f32 %v157
    %vm164 = vmor %vm162, %vm163
    %v165 = vsel %vm164, %v157, %v161
    %v166 = vand.u32 2147483647, %v108
    %vm167 = vcmp.eq.f32.partialorder %v166, 8.507059e+37
    %v168 = vand.u32 %v108, 2147483648
    %v169 = vor.u32 1.1754944e-38, %v168
    %v170 = vsel %vm167, %v169, %v165
    %v171 = vmul.f32 %v130, %v170
    %v172 = vmax.f32 %v156, 1e-08
    %v173 = vmax.f32 %v171, 1e-08
    %v174 = vmin.f32 %v172, 1.0
    %v175 = vmin.f32 %v173, 1.0
    %v176 = vlog2.pop %v174
    %v177 = vmul.f32 %v176, 0.6931472
    %v178 = vlog2.pop %v175
    %v179 = vmul.f32 %v178, 0.6931472
    %v180 = vsub.f32 1.0, %v174
    %v181 = vsub.f32 1.0, %v175
    %v182 = vmul.f32 %v180, %v180
    %v183 = vmul.f32 %v181, %v181
    %v184 = vsub.f32 0.0, %v138
    %v185 = vsub.f32 0.0, %v141
    %v186 = vmul.f32 %v184, %v182
    %v187 = vmul.f32 %v185, %v183
    %v188 = vmul.f32 %v186, %v177
    %v189 = vmul.f32 %v187, %v179
    %s190 = sadd.s32 0, 0
    %s191 = smul.u32 %s190, 16
    %v192 = vlaneseq
    %v193 = vshrl.u32 %v192, 7
    %v194 = vadd.s32 %v193, 8
    %v195 = vstv %s191
    %v196 = vadd.s32 %v195, %v193
    %v197 = vadd.s32 %v195, %v194
    %vm198 = vcmp.lt.s32.totalorder %v196, 16
    %vm199 = vcmp.lt.s32.totalorder %v197, 16
    %v200 = vsel %vm198, %v188, 0.0
    %v201 = vsel %vm199, %v189, 0.0
    %v202 = vld [vmem:[#allocation2] sm:$0x1]
    %vm203 = vcmask 7168
    %v204 = vsel %vm203, %v200, 0.0
    %v205 = vsel %vm203, %v201, 0.0
    %v206 = vadd.f32 %v204, %v205
    %207 = vadd.xlane.f32.xlu0 %v206
    %v208 = vpop.xlane.xlu0 %207
    %v209 = vrot.slane %v208, 4
    %v210 = vadd.f32 %v208, %v209
    %v211 = vrot.slane %v210, 2
    %v212 = vadd.f32 %v210, %v211
    %v213 = vrot.slane %v212, 1
    %v214 = vadd.f32 %v212, %v213
    %s215 = vtos %v214
    %v216 = vstv %s215
    %v217 = vadd.f32 %v202, %v216
    %vm218 = vcmask 0
    %219 = vst.msk [vmem:[#allocation2] sm:$0x1] %vm218, %v217
    // Predicated region
    $region18: #{tpu_custom_call.1} parent=1 // pred_check
      %p220 = pneg %p79
    $region19: #{tpu_custom_call.1} parent=1 // pred_check_branch
      %222 = sbr.rel (%p220) target = $region21
    $region20: #{tpu_custom_call.1} parent=1 // pred_region
      %v223 = vld [vmem:[#allocation2] sm:$0x1]
      %v224 = vadd.f32 %v223, 0.0
      %s225 = vtos %v224
      %v226 = vstv %s225
      %v227 = vadd.f32 %v226, 0.0
      %228 = vst [vmem:[#allocation3] sm:$0xff] %v227
    $region21: #{tpu_custom_call.1} parent=1 // pred_fallthru
      _
    // Predicated region
    $region22: #{tpu_custom_call.1} parent=1 // pred_check
      _
    $region23: #{tpu_custom_call.1} parent=1 // pred_check_branch
      %230 = sbr.rel (0) target = $region25
    $region24: #{tpu_custom_call.1} parent=1 // pred_region
      %232 = vsyncadd [#allocation4], 0
      %s234 = sshll.u32 [#allocation3], 4
      %s235 = int_to_ptr.vmem [resolvable:$true] %s234
      %s236 = sshll.u32 %s3, 4
      %s237 = int_to_ptr.hbm [resolvable:$true] %s236
      %239 = dma.vmem_to_hbm [thread:$0]  %s235, 128, %s237, [#allocation4]
    $region25: #{tpu_custom_call.1} parent=1 // pred_fallthru
      _
    // Predicated region
    $region26: #{tpu_custom_call.1} parent=1 // pred_check
      _
    $region27: #{tpu_custom_call.1} parent=1 // pred_check_branch
      %241 = sbr.rel (0) target = $region29
    $region28: #{tpu_custom_call.1} parent=1 // pred_region
      %243 = dma.done [#allocation4], 128
    $region29: #{tpu_custom_call.1} parent=1 // pred_fallthru
      _
    %244 = vsyncpa [#allocation4], 1

</llo_original>
